<compile_context>
chip_gen: v6e
topology: v6e:2x2x1
jax: 0.10.0
libtpu: 0.0.40
codegen_flags: <defaults>
</compile_context>

<pallas_src>
import jax
import jax.numpy as jnp
from jax import lax
from jax.experimental import pallas as pl
from jax.experimental.pallas import tpu as pltpu


def text_encoder_kernel(ids_ref, emb_ref, pooled_ref, x_ref, p_ref):
    # ids_ref:    SMEM (N,)       int32  -- flattened B*L token ids (scalar prefetch)
    # emb_ref:    VMEM (V, D)     f32    -- raw embedding table
    # pooled_ref: VMEM (V, D//2)  f32    -- max-pooled table (precomputed at init)
    # x_ref:      VMEM (N, D)     f32    -- gathered embeddings
    # p_ref:      VMEM (N, D//2)  f32    -- gathered pooled embeddings
    n = x_ref.shape[0]

    def body(i, carry):
        tok = ids_ref[i]  # scalar int32 read from SMEM
        # Direct dynamic-sublane row gather; pl.ds(_, 1) keeps the 2-D form,
        # which lowers to the same single dynamic-sublane vld/vst as row
        # indexing.  Exact by construction — no MXU / one-hot involved.
        x_ref[pl.ds(i, 1), :] = emb_ref[pl.ds(tok, 1), :]
        p_ref[pl.ds(i, 1), :] = pooled_ref[pl.ds(tok, 1), :]
        return carry

    # Visible loop (not a static Python for): bounds live ranges and lets the
    # scalar id load for row i+1 overlap row i's vector load/store.
    lax.fori_loop(0, n, body, None, unroll=True)


def init_text_encoder_params(emb):
    """One-time (param-init) prep: fold MaxPool1d(2) into a pooled table.

    Pooling a gathered row equals gathering from a pooled table, bit-for-bit,
    so this is done once here instead of on every forward call.
    """
    V, D = emb.shape
    assert D % 2 == 0, "MaxPool1d(2) over the embedding dim needs even out_c"
    pooled = emb.reshape(V, D // 2, 2).max(axis=-1)  # (V, D//2)
    return emb, pooled


def text_encoder_block(ids, emb, pooled):
    """Per-call path: one pallas_call + two free reshapes.

    ids: (B, L) int32 token ids; emb: (V, D) f32; pooled: (V, D//2) f32.
    Returns (x, p) matching TextEncoderBlock.forward.
    """
    B, L = ids.shape
    V, D = emb.shape
    half = pooled.shape[1]
    N = B * L
    ids_flat = ids.reshape(N).astype(jnp.int32)

    # Single grid step: tables (~66 KiB) + outputs (~3 KiB) fit VMEM with huge
    # margin on v5e/v6e (128 MiB) and v7x (64 MiB); with grid=(1,) the
    # BlockSpec double-buffering of the full-array blocks is moot.
    # Scaling notes (do not apply at this size):
    #  * If V*D grows toward v7x's smaller VMEM, tile the vocab or switch the
    #    tables to memory_space=pl.ANY with per-row DMA.
    #  * If B*L grows, make the output lane-dense (pack tokens per 128-lane
    #    row) first, and only then consider a "parallel" grid axis for megacore.
    x_flat, p_flat = pl.pallas_call(
        text_encoder_kernel,
        out_shape=(
            jax.ShapeDtypeStruct((N, D), jnp.float32),
            jax.ShapeDtypeStruct((N, half), jnp.float32),
        ),
        grid_spec=pltpu.PrefetchScalarGridSpec(
            num_scalar_prefetch=1,                       # ids -> SMEM
            grid=(1,),
            # block_shape == full array dims, so no (8,128) padding is needed.
            in_specs=[
                pl.BlockSpec((V, D), lambda i, ids_ref: (0, 0)),
                pl.BlockSpec((V, half), lambda i, ids_ref: (0, 0)),
            ],
            out_specs=[
                pl.BlockSpec((N, D), lambda i, ids_ref: (0, 0)),
                pl.BlockSpec((N, half), lambda i, ids_ref: (0, 0)),
            ],
        ),
        compiler_params=pltpu.CompilerParams(
            dimension_semantics=("arbitrary",)),
    )(ids_flat, emb, pooled)

    # NOTE: ids are assumed in [0, V); like any VMEM gather there is no runtime
    # bounds check (PyTorch's Embedding would raise).  Guard upstream if ids
    # are untrusted.
    # TODO(synk): add a custom_vjp if gradients ever need to flow to `emb`
    # through this kernel path (forward-only today, matching the spec).
    return x_flat.reshape(B, L, D), p_flat.reshape(B, L, half)


if __name__ == "__main__":
    OUT_C = 32          # embedding_dim (out_c)
    NUM_EMB = 262       # fixed by the module
    B, L = 2, 8

    key = jax.random.PRNGKey(0)
    k_emb, k_ids = jax.random.split(key)

    # nn.Embedding default init: N(0, 1)
    emb0 = jax.random.normal(k_emb, (NUM_EMB, OUT_C), dtype=jnp.float32)
    ids = jax.random.randint(k_ids, (B, L), 0, NUM_EMB, dtype=jnp.int32)

    # One-time table prep (param init), then a jitted per-call path.
    emb_tbl, pooled_tbl = init_text_encoder_params(emb0)
    fwd = jax.jit(text_encoder_block)

    x, p = fwd(ids, emb_tbl, pooled_tbl)
    jax.block_until_ready((x, p))

    # Pure-JAX reference (gather + pool are exact -> tight tolerances hold).
    x_ref = emb0[ids]                                            # (B, L, D)
    p_ref = x_ref.reshape(B, L, OUT_C // 2, 2).max(axis=-1)      # (B, L, D//2)
    assert x.shape == (B, L, OUT_C) and p.shape == (B, L, OUT_C // 2)
    assert jnp.allclose(x, x_ref, atol=1e-6, rtol=1e-6)
    assert jnp.allclose(p, p_ref, atol=1e-6, rtol=1e-6)

    print("KERNEL_OK")
</pallas_src>

<mosaic_0001>
module attributes {stable_mosaic.version = 11 : i64} {
  func.func @text_encoder_kernel(%arg0: i32, %arg1: memref<16xi32, #tpu.memory_space<smem>>, %arg2: memref<262x32xf32, #tpu.memory_space<vmem>>, %arg3: memref<262x16xf32, #tpu.memory_space<vmem>>, %arg4: memref<16x32xf32, #tpu.memory_space<vmem>>, %arg5: memref<16x16xf32, #tpu.memory_space<vmem>>) attributes {dimension_semantics = [#tpu.dimension_semantics<arbitrary>], iteration_bounds = array<i64: 1>, scalar_prefetch = 1 : i64, scratch_operands = 0 : i64, tpu.core_type = #tpu.core_type<tc>, window_params = [{pipeline_mode = #tpu.pipeline_mode<synchronous>, transform_indices = @transform_0, window_bounds = array<i64: 262, 32>}, {pipeline_mode = #tpu.pipeline_mode<synchronous>, transform_indices = @transform_1, window_bounds = array<i64: 262, 16>}, {pipeline_mode = #tpu.pipeline_mode<synchronous>, transform_indices = @transform_2, window_bounds = array<i64: 16, 32>}, {pipeline_mode = #tpu.pipeline_mode<synchronous>, transform_indices = @transform_3, window_bounds = array<i64: 16, 16>}]} {
    %c0_i32 = arith.constant 0 : i32
    %0 = arith.index_cast %c0_i32 : i32 to index
    %1 = memref.load %arg1[%0] : memref<16xi32, #tpu.memory_space<smem>>
    %2 = arith.index_cast %1 : i32 to index
    %c0 = arith.constant 0 : index
    %3 = vector.load %arg2[%2, %c0] : memref<262x32xf32, #tpu.memory_space<vmem>>, vector<1x32xf32>
    %4 = arith.index_cast %c0_i32 : i32 to index
    %c0_0 = arith.constant 0 : index
    %5 = vector.load %arg4[%4, %c0_0] : memref<16x32xf32, #tpu.memory_space<vmem>>, vector<1x32xf32>
    tpu.vector_store %arg4[%4, %c0_0], %3 {strides = array<i32>} : memref<16x32xf32, #tpu.memory_space<vmem>>, vector<1x32xf32>,
    %6 = arith.index_cast %1 : i32 to index
    %c0_1 = arith.constant 0 : index
    %7 = vector.load %arg3[%6, %c0_1] : memref<262x16xf32, #tpu.memory_space<vmem>>, vector<1x16xf32>
    %8 = arith.index_cast %c0_i32 : i32 to index
    %c0_2 = arith.constant 0 : index
    %9 = vector.load %arg5[%8, %c0_2] : memref<16x16xf32, #tpu.memory_space<vmem>>, vector<1x16xf32>
    tpu.vector_store %arg5[%8, %c0_2], %7 {strides = array<i32>} : memref<16x16xf32, #tpu.memory_space<vmem>>, vector<1x16xf32>,
    %c1_i32 = arith.constant 1 : i32
    %10 = arith.index_cast %c1_i32 : i32 to index
    %11 = memref.load %arg1[%10] : memref<16xi32, #tpu.memory_space<smem>>
    %12 = arith.index_cast %11 : i32 to index
    %c0_3 = arith.constant 0 : index
    %13 = vector.load %arg2[%12, %c0_3] : memref<262x32xf32, #tpu.memory_space<vmem>>, vector<1x32xf32>
    %14 = arith.index_cast %c1_i32 : i32 to index
    %c0_4 = arith.constant 0 : index
    %15 = vector.load %arg4[%14, %c0_4] : memref<16x32xf32, #tpu.memory_space<vmem>>, vector<1x32xf32>
    tpu.vector_store %arg4[%14, %c0_4], %13 {strides = array<i32>} : memref<16x32xf32, #tpu.memory_space<vmem>>, vector<1x32xf32>,
    %16 = arith.index_cast %11 : i32 to index
    %c0_5 = arith.constant 0 : index
    %17 = vector.load %arg3[%16, %c0_5] : memref<262x16xf32, #tpu.memory_space<vmem>>, vector<1x16xf32>
    %18 = arith.index_cast %c1_i32 : i32 to index
    %c0_6 = arith.constant 0 : index
    %19 = vector.load %arg5[%18, %c0_6] : memref<16x16xf32, #tpu.memory_space<vmem>>, vector<1x16xf32>
    tpu.vector_store %arg5[%18, %c0_6], %17 {strides = array<i32>} : memref<16x16xf32, #tpu.memory_space<vmem>>, vector<1x16xf32>,
    %c2_i32 = arith.constant 2 : i32
    %20 = arith.index_cast %c2_i32 : i32 to index
    %21 = memref.load %arg1[%20] : memref<16xi32, #tpu.memory_space<smem>>
    %22 = arith.index_cast %21 : i32 to index
    %c0_7 = arith.constant 0 : index
    %23 = vector.load %arg2[%22, %c0_7] : memref<262x32xf32, #tpu.memory_space<vmem>>, vector<1x32xf32>
    %24 = arith.index_cast %c2_i32 : i32 to index
    %c0_8 = arith.constant 0 : index
    %25 = vector.load %arg4[%24, %c0_8] : memref<16x32xf32, #tpu.memory_space<vmem>>, vector<1x32xf32>
    tpu.vector_store %arg4[%24, %c0_8], %23 {strides = array<i32>} : memref<16x32xf32, #tpu.memory_space<vmem>>, vector<1x32xf32>,
    %26 = arith.index_cast %21 : i32 to index
    %c0_9 = arith.constant 0 : index
    %27 = vector.load %arg3[%26, %c0_9] : memref<262x16xf32, #tpu.memory_space<vmem>>, vector<1x16xf32>
    %28 = arith.index_cast %c2_i32 : i32 to index
    %c0_10 = arith.constant 0 : index
    %29 = vector.load %arg5[%28, %c0_10] : memref<16x16xf32, #tpu.memory_space<vmem>>, vector<1x16xf32>
    tpu.vector_store %arg5[%28, %c0_10], %27 {strides = array<i32>} : memref<16x16xf32, #tpu.memory_space<vmem>>, vector<1x16xf32>,
    %c3_i32 = arith.constant 3 : i32
    %30 = arith.index_cast %c3_i32 : i32 to index
    %31 = memref.load %arg1[%30] : memref<16xi32, #tpu.memory_space<smem>>
    %32 = arith.index_cast %31 : i32 to index
    %c0_11 = arith.constant 0 : index
    %33 = vector.load %arg2[%32, %c0_11] : memref<262x32xf32, #tpu.memory_space<vmem>>, vector<1x32xf32>
    %34 = arith.index_cast %c3_i32 : i32 to index
    %c0_12 = arith.constant 0 : index
    %35 = vector.load %arg4[%34, %c0_12] : memref<16x32xf32, #tpu.memory_space<vmem>>, vector<1x32xf32>
    tpu.vector_store %arg4[%34, %c0_12], %33 {strides = array<i32>} : memref<16x32xf32, #tpu.memory_space<vmem>>, vector<1x32xf32>,
    %36 = arith.index_cast %31 : i32 to index
    %c0_13 = arith.constant 0 : index
    %37 = vector.load %arg3[%36, %c0_13] : memref<262x16xf32, #tpu.memory_space<vmem>>, vector<1x16xf32>
    %38 = arith.index_cast %c3_i32 : i32 to index
    %c0_14 = arith.constant 0 : index
    %39 = vector.load %arg5[%38, %c0_14] : memref<16x16xf32, #tpu.memory_space<vmem>>, vector<1x16xf32>
    tpu.vector_store %arg5[%38, %c0_14], %37 {strides = array<i32>} : memref<16x16xf32, #tpu.memory_space<vmem>>, vector<1x16xf32>,
    %c4_i32 = arith.constant 4 : i32
    %40 = arith.index_cast %c4_i32 : i32 to index
    %41 = memref.load %arg1[%40] : memref<16xi32, #tpu.memory_space<smem>>
    %42 = arith.index_cast %41 : i32 to index
    %c0_15 = arith.constant 0 : index
    %43 = vector.load %arg2[%42, %c0_15] : memref<262x32xf32, #tpu.memory_space<vmem>>, vector<1x32xf32>
    %44 = arith.index_cast %c4_i32 : i32 to index
    %c0_16 = arith.constant 0 : index
    %45 = vector.load %arg4[%44, %c0_16] : memref<16x32xf32, #tpu.memory_space<vmem>>, vector<1x32xf32>
    tpu.vector_store %arg4[%44, %c0_16], %43 {strides = array<i32>} : memref<16x32xf32, #tpu.memory_space<vmem>>, vector<1x32xf32>,
    %46 = arith.index_cast %41 : i32 to index
    %c0_17 = arith.constant 0 : index
    %47 = vector.load %arg3[%46, %c0_17] : memref<262x16xf32, #tpu.memory_space<vmem>>, vector<1x16xf32>
    %48 = arith.index_cast %c4_i32 : i32 to index
    %c0_18 = arith.constant 0 : index
    %49 = vector.load %arg5[%48, %c0_18] : memref<16x16xf32, #tpu.memory_space<vmem>>, vector<1x16xf32>
    tpu.vector_store %arg5[%48, %c0_18], %47 {strides = array<i32>} : memref<16x16xf32, #tpu.memory_space<vmem>>, vector<1x16xf32>,
    %c5_i32 = arith.constant 5 : i32
    %50 = arith.index_cast %c5_i32 : i32 to index
    %51 = memref.load %arg1[%50] : memref<16xi32, #tpu.memory_space<smem>>
    %52 = arith.index_cast %51 : i32 to index
    %c0_19 = arith.constant 0 : index
    %53 = vector.load %arg2[%52, %c0_19] : memref<262x32xf32, #tpu.memory_space<vmem>>, vector<1x32xf32>
    %54 = arith.index_cast %c5_i32 : i32 to index
    %c0_20 = arith.constant 0 : index
    %55 = vector.load %arg4[%54, %c0_20] : memref<16x32xf32, #tpu.memory_space<vmem>>, vector<1x32xf32>
    tpu.vector_store %arg4[%54, %c0_20], %53 {strides = array<i32>} : memref<16x32xf32, #tpu.memory_space<vmem>>, vector<1x32xf32>,
    %56 = arith.index_cast %51 : i32 to index
    %c0_21 = arith.constant 0 : index
    %57 = vector.load %arg3[%56, %c0_21] : memref<262x16xf32, #tpu.memory_space<vmem>>, vector<1x16xf32>
    %58 = arith.index_cast %c5_i32 : i32 to index
    %c0_22 = arith.constant 0 : index
    %59 = vector.load %arg5[%58, %c0_22] : memref<16x16xf32, #tpu.memory_space<vmem>>, vector<1x16xf32>
    tpu.vector_store %arg5[%58, %c0_22], %57 {strides = array<i32>} : memref<16x16xf32, #tpu.memory_space<vmem>>, vector<1x16xf32>,
    %c6_i32 = arith.constant 6 : i32
    %60 = arith.index_cast %c6_i32 : i32 to index
    %61 = memref.load %arg1[%60] : memref<16xi32, #tpu.memory_space<smem>>
    %62 = arith.index_cast %61 : i32 to index
    %c0_23 = arith.constant 0 : index
    %63 = vector.load %arg2[%62, %c0_23] : memref<262x32xf32, #tpu.memory_space<vmem>>, vector<1x32xf32>
    %64 = arith.index_cast %c6_i32 : i32 to index
    %c0_24 = arith.constant 0 : index
    %65 = vector.load %arg4[%64, %c0_24] : memref<16x32xf32, #tpu.memory_space<vmem>>, vector<1x32xf32>
    tpu.vector_store %arg4[%64, %c0_24], %63 {strides = array<i32>} : memref<16x32xf32, #tpu.memory_space<vmem>>, vector<1x32xf32>,
    %66 = arith.index_cast %61 : i32 to index
    %c0_25 = arith.constant 0 : index
    %67 = vector.load %arg3[%66, %c0_25] : memref<262x16xf32, #tpu.memory_space<vmem>>, vector<1x16xf32>
    %68 = arith.index_cast %c6_i32 : i32 to index
    %c0_26 = arith.constant 0 : index
    %69 = vector.load %arg5[%68, %c0_26] : memref<16x16xf32, #tpu.memory_space<vmem>>, vector<1x16xf32>
    tpu.vector_store %arg5[%68, %c0_26], %67 {strides = array<i32>} : memref<16x16xf32, #tpu.memory_space<vmem>>, vector<1x16xf32>,
    %c7_i32 = arith.constant 7 : i32
    %70 = arith.index_cast %c7_i32 : i32 to index
    %71 = memref.load %arg1[%70] : memref<16xi32, #tpu.memory_space<smem>>
    %72 = arith.index_cast %71 : i32 to index
    %c0_27 = arith.constant 0 : index
    %73 = vector.load %arg2[%72, %c0_27] : memref<262x32xf32, #tpu.memory_space<vmem>>, vector<1x32xf32>
    %74 = arith.index_cast %c7_i32 : i32 to index
    %c0_28 = arith.constant 0 : index
    %75 = vector.load %arg4[%74, %c0_28] : memref<16x32xf32, #tpu.memory_space<vmem>>, vector<1x32xf32>
    tpu.vector_store %arg4[%74, %c0_28], %73 {strides = array<i32>} : memref<16x32xf32, #tpu.memory_space<vmem>>, vector<1x32xf32>,
    %76 = arith.index_cast %71 : i32 to index
    %c0_29 = arith.constant 0 : index
    %77 = vector.load %arg3[%76, %c0_29] : memref<262x16xf32, #tpu.memory_space<vmem>>, vector<1x16xf32>
    %78 = arith.index_cast %c7_i32 : i32 to index
    %c0_30 = arith.constant 0 : index
    %79 = vector.load %arg5[%78, %c0_30] : memref<16x16xf32, #tpu.memory_space<vmem>>, vector<1x16xf32>
    tpu.vector_store %arg5[%78, %c0_30], %77 {strides = array<i32>} : memref<16x16xf32, #tpu.memory_space<vmem>>, vector<1x16xf32>,
    %c8_i32 = arith.constant 8 : i32
    %80 = arith.index_cast %c8_i32 : i32 to index
    %81 = memref.load %arg1[%80] : memref<16xi32, #tpu.memory_space<smem>>
    %82 = arith.index_cast %81 : i32 to index
    %c0_31 = arith.constant 0 : index
    %83 = vector.load %arg2[%82, %c0_31] : memref<262x32xf32, #tpu.memory_space<vmem>>, vector<1x32xf32>
    %84 = arith.index_cast %c8_i32 : i32 to index
    %c0_32 = arith.constant 0 : index
    %85 = vector.load %arg4[%84, %c0_32] : memref<16x32xf32, #tpu.memory_space<vmem>>, vector<1x32xf32>
    tpu.vector_store %arg4[%84, %c0_32], %83 {strides = array<i32>} : memref<16x32xf32, #tpu.memory_space<vmem>>, vector<1x32xf32>,
    %86 = arith.index_cast %81 : i32 to index
    %c0_33 = arith.constant 0 : index
    %87 = vector.load %arg3[%86, %c0_33] : memref<262x16xf32, #tpu.memory_space<vmem>>, vector<1x16xf32>
    %88 = arith.index_cast %c8_i32 : i32 to index
    %c0_34 = arith.constant 0 : index
    %89 = vector.load %arg5[%88, %c0_34] : memref<16x16xf32, #tpu.memory_space<vmem>>, vector<1x16xf32>
    tpu.vector_store %arg5[%88, %c0_34], %87 {strides = array<i32>} : memref<16x16xf32, #tpu.memory_space<vmem>>, vector<1x16xf32>,
    %c9_i32 = arith.constant 9 : i32
    %90 = arith.index_cast %c9_i32 : i32 to index
    %91 = memref.load %arg1[%90] : memref<16xi32, #tpu.memory_space<smem>>
    %92 = arith.index_cast %91 : i32 to index
    %c0_35 = arith.constant 0 : index
    %93 = vector.load %arg2[%92, %c0_35] : memref<262x32xf32, #tpu.memory_space<vmem>>, vector<1x32xf32>
    %94 = arith.index_cast %c9_i32 : i32 to index
    %c0_36 = arith.constant 0 : index
    %95 = vector.load %arg4[%94, %c0_36] : memref<16x32xf32, #tpu.memory_space<vmem>>, vector<1x32xf32>
    tpu.vector_store %arg4[%94, %c0_36], %93 {strides = array<i32>} : memref<16x32xf32, #tpu.memory_space<vmem>>, vector<1x32xf32>,
    %96 = arith.index_cast %91 : i32 to index
    %c0_37 = arith.constant 0 : index
    %97 = vector.load %arg3[%96, %c0_37] : memref<262x16xf32, #tpu.memory_space<vmem>>, vector<1x16xf32>
    %98 = arith.index_cast %c9_i32 : i32 to index
    %c0_38 = arith.constant 0 : index
    %99 = vector.load %arg5[%98, %c0_38] : memref<16x16xf32, #tpu.memory_space<vmem>>, vector<1x16xf32>
    tpu.vector_store %arg5[%98, %c0_38], %97 {strides = array<i32>} : memref<16x16xf32, #tpu.memory_space<vmem>>, vector<1x16xf32>,
    %c10_i32 = arith.constant 10 : i32
    %100 = arith.index_cast %c10_i32 : i32 to index
    %101 = memref.load %arg1[%100] : memref<16xi32, #tpu.memory_space<smem>>
    %102 = arith.index_cast %101 : i32 to index
    %c0_39 = arith.constant 0 : index
    %103 = vector.load %arg2[%102, %c0_39] : memref<262x32xf32, #tpu.memory_space<vmem>>, vector<1x32xf32>
    %104 = arith.index_cast %c10_i32 : i32 to index
    %c0_40 = arith.constant 0 : index
    %105 = vector.load %arg4[%104, %c0_40] : memref<16x32xf32, #tpu.memory_space<vmem>>, vector<1x32xf32>
    tpu.vector_store %arg4[%104, %c0_40], %103 {strides = array<i32>} : memref<16x32xf32, #tpu.memory_space<vmem>>, vector<1x32xf32>,
    %106 = arith.index_cast %101 : i32 to index
    %c0_41 = arith.constant 0 : index
    %107 = vector.load %arg3[%106, %c0_41] : memref<262x16xf32, #tpu.memory_space<vmem>>, vector<1x16xf32>
    %108 = arith.index_cast %c10_i32 : i32 to index
    %c0_42 = arith.constant 0 : index
    %109 = vector.load %arg5[%108, %c0_42] : memref<16x16xf32, #tpu.memory_space<vmem>>, vector<1x16xf32>
    tpu.vector_store %arg5[%108, %c0_42], %107 {strides = array<i32>} : memref<16x16xf32, #tpu.memory_space<vmem>>, vector<1x16xf32>,
    %c11_i32 = arith.constant 11 : i32
    %110 = arith.index_cast %c11_i32 : i32 to index
    %111 = memref.load %arg1[%110] : memref<16xi32, #tpu.memory_space<smem>>
    %112 = arith.index_cast %111 : i32 to index
    %c0_43 = arith.constant 0 : index
    %113 = vector.load %arg2[%112, %c0_43] : memref<262x32xf32, #tpu.memory_space<vmem>>, vector<1x32xf32>
    %114 = arith.index_cast %c11_i32 : i32 to index
    %c0_44 = arith.constant 0 : index
    %115 = vector.load %arg4[%114, %c0_44] : memref<16x32xf32, #tpu.memory_space<vmem>>, vector<1x32xf32>
    tpu.vector_store %arg4[%114, %c0_44], %113 {strides = array<i32>} : memref<16x32xf32, #tpu.memory_space<vmem>>, vector<1x32xf32>,
    %116 = arith.index_cast %111 : i32 to index
    %c0_45 = arith.constant 0 : index
    %117 = vector.load %arg3[%116, %c0_45] : memref<262x16xf32, #tpu.memory_space<vmem>>, vector<1x16xf32>
    %118 = arith.index_cast %c11_i32 : i32 to index
    %c0_46 = arith.constant 0 : index
    %119 = vector.load %arg5[%118, %c0_46] : memref<16x16xf32, #tpu.memory_space<vmem>>, vector<1x16xf32>
    tpu.vector_store %arg5[%118, %c0_46], %117 {strides = array<i32>} : memref<16x16xf32, #tpu.memory_space<vmem>>, vector<1x16xf32>,
    %c12_i32 = arith.constant 12 : i32
    %120 = arith.index_cast %c12_i32 : i32 to index
    %121 = memref.load %arg1[%120] : memref<16xi32, #tpu.memory_space<smem>>
    %122 = arith.index_cast %121 : i32 to index
    %c0_47 = arith.constant 0 : index
    %123 = vector.load %arg2[%122, %c0_47] : memref<262x32xf32, #tpu.memory_space<vmem>>, vector<1x32xf32>
    %124 = arith.index_cast %c12_i32 : i32 to index
    %c0_48 = arith.constant 0 : index
    %125 = vector.load %arg4[%124, %c0_48] : memref<16x32xf32, #tpu.memory_space<vmem>>, vector<1x32xf32>
    tpu.vector_store %arg4[%124, %c0_48], %123 {strides = array<i32>} : memref<16x32xf32, #tpu.memory_space<vmem>>, vector<1x32xf32>,
    %126 = arith.index_cast %121 : i32 to index
    %c0_49 = arith.constant 0 : index
    %127 = vector.load %arg3[%126, %c0_49] : memref<262x16xf32, #tpu.memory_space<vmem>>, vector<1x16xf32>
    %128 = arith.index_cast %c12_i32 : i32 to index
    %c0_50 = arith.constant 0 : index
    %129 = vector.load %arg5[%128, %c0_50] : memref<16x16xf32, #tpu.memory_space<vmem>>, vector<1x16xf32>
    tpu.vector_store %arg5[%128, %c0_50], %127 {strides = array<i32>} : memref<16x16xf32, #tpu.memory_space<vmem>>, vector<1x16xf32>,
    %c13_i32 = arith.constant 13 : i32
    %130 = arith.index_cast %c13_i32 : i32 to index
    %131 = memref.load %arg1[%130] : memref<16xi32, #tpu.memory_space<smem>>
    %132 = arith.index_cast %131 : i32 to index
    %c0_51 = arith.constant 0 : index
    %133 = vector.load %arg2[%132, %c0_51] : memref<262x32xf32, #tpu.memory_space<vmem>>, vector<1x32xf32>
    %134 = arith.index_cast %c13_i32 : i32 to index
    %c0_52 = arith.constant 0 : index
    %135 = vector.load %arg4[%134, %c0_52] : memref<16x32xf32, #tpu.memory_space<vmem>>, vector<1x32xf32>
    tpu.vector_store %arg4[%134, %c0_52], %133 {strides = array<i32>} : memref<16x32xf32, #tpu.memory_space<vmem>>, vector<1x32xf32>,
    %136 = arith.index_cast %131 : i32 to index
    %c0_53 = arith.constant 0 : index
    %137 = vector.load %arg3[%136, %c0_53] : memref<262x16xf32, #tpu.memory_space<vmem>>, vector<1x16xf32>
    %138 = arith.index_cast %c13_i32 : i32 to index
    %c0_54 = arith.constant 0 : index
    %139 = vector.load %arg5[%138, %c0_54] : memref<16x16xf32, #tpu.memory_space<vmem>>, vector<1x16xf32>
    tpu.vector_store %arg5[%138, %c0_54], %137 {strides = array<i32>} : memref<16x16xf32, #tpu.memory_space<vmem>>, vector<1x16xf32>,
    %c14_i32 = arith.constant 14 : i32
    %140 = arith.index_cast %c14_i32 : i32 to index
    %141 = memref.load %arg1[%140] : memref<16xi32, #tpu.memory_space<smem>>
    %142 = arith.index_cast %141 : i32 to index
    %c0_55 = arith.constant 0 : index
    %143 = vector.load %arg2[%142, %c0_55] : memref<262x32xf32, #tpu.memory_space<vmem>>, vector<1x32xf32>
    %144 = arith.index_cast %c14_i32 : i32 to index
    %c0_56 = arith.constant 0 : index
    %145 = vector.load %arg4[%144, %c0_56] : memref<16x32xf32, #tpu.memory_space<vmem>>, vector<1x32xf32>
    tpu.vector_store %arg4[%144, %c0_56], %143 {strides = array<i32>} : memref<16x32xf32, #tpu.memory_space<vmem>>, vector<1x32xf32>,
    %146 = arith.index_cast %141 : i32 to index
    %c0_57 = arith.constant 0 : index
    %147 = vector.load %arg3[%146, %c0_57] : memref<262x16xf32, #tpu.memory_space<vmem>>, vector<1x16xf32>
    %148 = arith.index_cast %c14_i32 : i32 to index
    %c0_58 = arith.constant 0 : index
    %149 = vector.load %arg5[%148, %c0_58] : memref<16x16xf32, #tpu.memory_space<vmem>>, vector<1x16xf32>
    tpu.vector_store %arg5[%148, %c0_58], %147 {strides = array<i32>} : memref<16x16xf32, #tpu.memory_space<vmem>>, vector<1x16xf32>,
    %c15_i32 = arith.constant 15 : i32
    %150 = arith.index_cast %c15_i32 : i32 to index
    %151 = memref.load %arg1[%150] : memref<16xi32, #tpu.memory_space<smem>>
    %152 = arith.index_cast %151 : i32 to index
    %c0_59 = arith.constant 0 : index
    %153 = vector.load %arg2[%152, %c0_59] : memref<262x32xf32, #tpu.memory_space<vmem>>, vector<1x32xf32>
    %154 = arith.index_cast %c15_i32 : i32 to index
    %c0_60 = arith.constant 0 : index
    %155 = vector.load %arg4[%154, %c0_60] : memref<16x32xf32, #tpu.memory_space<vmem>>, vector<1x32xf32>
    tpu.vector_store %arg4[%154, %c0_60], %153 {strides = array<i32>} : memref<16x32xf32, #tpu.memory_space<vmem>>, vector<1x32xf32>,
    %156 = arith.index_cast %151 : i32 to index
    %c0_61 = arith.constant 0 : index
    %157 = vector.load %arg3[%156, %c0_61] : memref<262x16xf32, #tpu.memory_space<vmem>>, vector<1x16xf32>
    %158 = arith.index_cast %c15_i32 : i32 to index
    %c0_62 = arith.constant 0 : index
    %159 = vector.load %arg5[%158, %c0_62] : memref<16x16xf32, #tpu.memory_space<vmem>>, vector<1x16xf32>
    tpu.vector_store %arg5[%158, %c0_62], %157 {strides = array<i32>} : memref<16x16xf32, #tpu.memory_space<vmem>>, vector<1x16xf32>,
    %c16_i32 = arith.constant 16 : i32
    return
  }
  func.func @transform_0(%arg0: i32, %arg1: memref<16xi32, #tpu.memory_space<smem>>) -> (i32, i32) {
    %c0_i32 = arith.constant 0 : i32
    %c0_i32_0 = arith.constant 0 : i32
    %c0_i32_1 = arith.constant 0 : i32
    return %c0_i32, %c0_i32_0 : i32, i32
  }
  func.func @transform_1(%arg0: i32, %arg1: memref<16xi32, #tpu.memory_space<smem>>) -> (i32, i32) {
    %c0_i32 = arith.constant 0 : i32
    %c0_i32_0 = arith.constant 0 : i32
    %c0_i32_1 = arith.constant 0 : i32
    return %c0_i32, %c0_i32_0 : i32, i32
  }
  func.func @transform_2(%arg0: i32, %arg1: memref<16xi32, #tpu.memory_space<smem>>) -> (i32, i32) {
    %c0_i32 = arith.constant 0 : i32
    %c0_i32_0 = arith.constant 0 : i32
    %c0_i32_1 = arith.constant 0 : i32
    return %c0_i32, %c0_i32_0 : i32, i32
  }
  func.func @transform_3(%arg0: i32, %arg1: memref<16xi32, #tpu.memory_space<smem>>) -> (i32, i32) {
    %c0_i32 = arith.constant 0 : i32
    %c0_i32_0 = arith.constant 0 : i32
    %c0_i32_1 = arith.constant 0 : i32
    return %c0_i32, %c0_i32_0 : i32, i32
  }
}

</mosaic_0001>

<llo_original>
// kernel: text_encoder_block.1
$region0: #{text_encoder_block.1}
  #allocation0 [shape = 'u32[]', space=smem, size = 0x4, offset = 0x4, fixed_abs, tag = 'smem constant byte address 0x4 - core index']
  #allocation1 [shape = 'u32[144,128]{1,0:T(1,128)}', space=vmem, size = 0x12000, scoped, tag = 'internal scratch']
  #allocation2 [shape = 's32[1]{0}', space=sflag, size = 0x4, scoped, tag = 'scoped memory for text_encoder_block.1']
  #allocation3 [shape = 'u8[512]{0}', space=smem, size = 0x200, scoped, tag = 'prefetched SMEM operand 0']
  %s0 = inlined_call_operand.vmem [shape: s32[16], index: 0, kind: input, shape index: {}]
  %s1 = inlined_call_operand.vmem [shape: f32[262,32], index: 1, kind: input, shape index: {}]
  %s2 = inlined_call_operand.vmem [shape: f32[262,16], index: 2, kind: input, shape index: {}]
  %s3 = inlined_call_operand.hbm [shape: f32[16,32], index: 3, kind: output, shape index: {0}]
  %s4 = inlined_call_operand.hbm [shape: f32[16,16], index: 4, kind: output, shape index: {1}]
  %5 = xla_tuple %s3, %s4
  %s6 = sld [smem:[#allocation0]]
  $region26: #{text_encoder_block.1} parent=0
    _
  %s8 = ssub.s32 1, %s6
  %s9 = scalar_select 0, %s8, %s6
  %s10 = sshll.u32 %s0, 4
  %s11 = int_to_ptr.vmem [resolvable:$true] %s10
  %13 = dma.vmem_to_smem %s11, 16, [#allocation3], [#allocation2]
  %14 = dma.done [#allocation2], 16
  %15 = sfence
  $region1: #{text_encoder_block.1} parent=0
    #allocation4 [shape = 'u8[8192]{0}', space=vmem, size = 0x2000, scoped, tag = 'output window, operand 0, single buffered']
    #allocation5 [shape = 's32[1]{0}', space=sflag, size = 0x4, scoped, tag = 'scoped memory for text_encoder_block.1']
    #allocation6 [shape = 'u8[8192]{0}', space=vmem, size = 0x2000, scoped, tag = 'output window, operand 1, single buffered']
    #allocation7 [shape = 's32[1]{0}', space=sflag, size = 0x4, scoped, tag = 'scoped memory for text_encoder_block.1']
    %16 = vsyncpa [#allocation5], 0
    %17 = vsyncpa [#allocation7], 0
    // Predicated region
    $region2: #{text_encoder_block.1} parent=1 // pred_check
      _
    $region3: #{text_encoder_block.1} parent=1 // pred_check_branch
      %19 = sbr.rel (0) target = $region5
    $region4: #{text_encoder_block.1} parent=1 // pred_region
      _
    $region5: #{text_encoder_block.1} parent=1 // pred_fallthru
      _
    // Predicated region
    $region6: #{text_encoder_block.1} parent=1 // pred_check
      _
    $region7: #{text_encoder_block.1} parent=1 // pred_check_branch
      %21 = sbr.rel (0) target = $region9
    $region8: #{text_encoder_block.1} parent=1 // pred_region
      _
    $region9: #{text_encoder_block.1} parent=1 // pred_fallthru
      _
    %s22 = sld [smem:[#allocation3]]
    %s23 = scalar_lea.vmem %s1, %s22
    %v24 = vld [vmem:[%s23] sm:$0x1]
    %vm25 = vcmask 253952
    %26 = vst.msk [vmem:[#allocation4] sm:$0x1] %vm25, %v24
    %s27 = scalar_lea.vmem %s2, %s22
    %v28 = vld [vmem:[%s27] sm:$0x1]
    %vm29 = vcmask 122880
    %30 = vst.msk [vmem:[#allocation6] sm:$0x1] %vm29, %v28
    %s31 = sld [smem:[#allocation3 + $0x1]]
    %s32 = scalar_lea.vmem %s1, %s31
    %v33 = vld [vmem:[%s32] sm:$0x1]
    %34 = vst.msk [vmem:[#allocation4 + $0x1] sm:$0x1] %vm25, %v33
    %s35 = scalar_lea.vmem %s2, %s31
    %v36 = vld [vmem:[%s35] sm:$0x1]
    %37 = vst.msk [vmem:[#allocation6 + $0x1] sm:$0x1] %vm29, %v36
    %s38 = sld [smem:[#allocation3 + $0x2]]
    %s39 = scalar_lea.vmem %s1, %s38
    %v40 = vld [vmem:[%s39] sm:$0x1]
    %41 = vst.msk [vmem:[#allocation4 + $0x2] sm:$0x1] %vm25, %v40
    %s42 = scalar_lea.vmem %s2, %s38
    %v43 = vld [vmem:[%s42] sm:$0x1]
    %44 = vst.msk [vmem:[#allocation6 + $0x2] sm:$0x1] %vm29, %v43
    %s45 = sld [smem:[#allocation3 + $0x3]]
    %s46 = scalar_lea.vmem %s1, %s45
    %v47 = vld [vmem:[%s46] sm:$0x1]
    %48 = vst.msk [vmem:[#allocation4 + $0x3] sm:$0x1] %vm25, %v47
    %s49 = scalar_lea.vmem %s2, %s45
    %v50 = vld [vmem:[%s49] sm:$0x1]
    %51 = vst.msk [vmem:[#allocation6 + $0x3] sm:$0x1] %vm29, %v50
    %s52 = sld [smem:[#allocation3 + $0x4]]
    %s53 = scalar_lea.vmem %s1, %s52
    %v54 = vld [vmem:[%s53] sm:$0x1]
    %55 = vst.msk [vmem:[#allocation4 + $0x4] sm:$0x1] %vm25, %v54
    %s56 = scalar_lea.vmem %s2, %s52
    %v57 = vld [vmem:[%s56] sm:$0x1]
    %58 = vst.msk [vmem:[#allocation6 + $0x4] sm:$0x1] %vm29, %v57
    %s59 = sld [smem:[#allocation3 + $0x5]]
    %s60 = scalar_lea.vmem %s1, %s59
    %v61 = vld [vmem:[%s60] sm:$0x1]
    %62 = vst.msk [vmem:[#allocation4 + $0x5] sm:$0x1] %vm25, %v61
    %s63 = scalar_lea.vmem %s2, %s59
    %v64 = vld [vmem:[%s63] sm:$0x1]
    %65 = vst.msk [vmem:[#allocation6 + $0x5] sm:$0x1] %vm29, %v64
    %s66 = sld [smem:[#allocation3 + $0x6]]
    %s67 = scalar_lea.vmem %s1, %s66
    %v68 = vld [vmem:[%s67] sm:$0x1]
    %69 = vst.msk [vmem:[#allocation4 + $0x6] sm:$0x1] %vm25, %v68
    %s70 = scalar_lea.vmem %s2, %s66
    %v71 = vld [vmem:[%s70] sm:$0x1]
    %72 = vst.msk [vmem:[#allocation6 + $0x6] sm:$0x1] %vm29, %v71
    %s73 = sld [smem:[#allocation3 + $0x7]]
    %s74 = scalar_lea.vmem %s1, %s73
    %v75 = vld [vmem:[%s74] sm:$0x1]
    %76 = vst.msk [vmem:[#allocation4 + $0x7] sm:$0x1] %vm25, %v75
    %s77 = scalar_lea.vmem %s2, %s73
    %v78 = vld [vmem:[%s77] sm:$0x1]
    %79 = vst.msk [vmem:[#allocation6 + $0x7] sm:$0x1] %vm29, %v78
    %s80 = sld [smem:[#allocation3 + $0x8]]
    %s81 = scalar_lea.vmem %s1, %s80
    %v82 = vld [vmem:[%s81] sm:$0x1]
    %83 = vst.msk [vmem:[#allocation4 + $0x8] sm:$0x1] %vm25, %v82
    %s84 = scalar_lea.vmem %s2, %s80
    %v85 = vld [vmem:[%s84] sm:$0x1]
    %86 = vst.msk [vmem:[#allocation6 + $0x8] sm:$0x1] %vm29, %v85
    %s87 = sld [smem:[#allocation3 + $0x9]]
    %s88 = scalar_lea.vmem %s1, %s87
    %v89 = vld [vmem:[%s88] sm:$0x1]
    %90 = vst.msk [vmem:[#allocation4 + $0x9] sm:$0x1] %vm25, %v89
    %s91 = scalar_lea.vmem %s2, %s87
    %v92 = vld [vmem:[%s91] sm:$0x1]
    %93 = vst.msk [vmem:[#allocation6 + $0x9] sm:$0x1] %vm29, %v92
    %s94 = sld [smem:[#allocation3 + $0xa]]
    %s95 = scalar_lea.vmem %s1, %s94
    %v96 = vld [vmem:[%s95] sm:$0x1]
    %97 = vst.msk [vmem:[#allocation4 + $0xa] sm:$0x1] %vm25, %v96
    %s98 = scalar_lea.vmem %s2, %s94
    %v99 = vld [vmem:[%s98] sm:$0x1]
    %100 = vst.msk [vmem:[#allocation6 + $0xa] sm:$0x1] %vm29, %v99
    %s101 = sld [smem:[#allocation3 + $0xb]]
    %s102 = scalar_lea.vmem %s1, %s101
    %v103 = vld [vmem:[%s102] sm:$0x1]
    %104 = vst.msk [vmem:[#allocation4 + $0xb] sm:$0x1] %vm25, %v103
    %s105 = scalar_lea.vmem %s2, %s101
    %v106 = vld [vmem:[%s105] sm:$0x1]
    %107 = vst.msk [vmem:[#allocation6 + $0xb] sm:$0x1] %vm29, %v106
    %s108 = sld [smem:[#allocation3 + $0xc]]
    %s109 = scalar_lea.vmem %s1, %s108
    %v110 = vld [vmem:[%s109] sm:$0x1]
    %111 = vst.msk [vmem:[#allocation4 + $0xc] sm:$0x1] %vm25, %v110
    %s112 = scalar_lea.vmem %s2, %s108
    %v113 = vld [vmem:[%s112] sm:$0x1]
    %114 = vst.msk [vmem:[#allocation6 + $0xc] sm:$0x1] %vm29, %v113
    %s115 = sld [smem:[#allocation3 + $0xd]]
    %s116 = scalar_lea.vmem %s1, %s115
    %v117 = vld [vmem:[%s116] sm:$0x1]
    %118 = vst.msk [vmem:[#allocation4 + $0xd] sm:$0x1] %vm25, %v117
    %s119 = scalar_lea.vmem %s2, %s115
    %v120 = vld [vmem:[%s119] sm:$0x1]
    %121 = vst.msk [vmem:[#allocation6 + $0xd] sm:$0x1] %vm29, %v120
    %s122 = sld [smem:[#allocation3 + $0xe]]
    %s123 = scalar_lea.vmem %s1, %s122
    %v124 = vld [vmem:[%s123] sm:$0x1]
    %125 = vst.msk [vmem:[#allocation4 + $0xe] sm:$0x1] %vm25, %v124
    %s126 = scalar_lea.vmem %s2, %s122
    %v127 = vld [vmem:[%s126] sm:$0x1]
    %128 = vst.msk [vmem:[#allocation6 + $0xe] sm:$0x1] %vm29, %v127
    %s129 = sld [smem:[#allocation3 + $0xf]]
    %s130 = scalar_lea.vmem %s1, %s129
    %v131 = vld [vmem:[%s130] sm:$0x1]
    %132 = vst.msk [vmem:[#allocation4 + $0xf] sm:$0x1] %vm25, %v131
    %s133 = scalar_lea.vmem %s2, %s129
    %v134 = vld [vmem:[%s133] sm:$0x1]
    %135 = vst.msk [vmem:[#allocation6 + $0xf] sm:$0x1] %vm29, %v134
    // Predicated region
    $region10: #{text_encoder_block.1} parent=1 // pred_check
      _
    $region11: #{text_encoder_block.1} parent=1 // pred_check_branch
      %137 = sbr.rel (0) target = $region13
    $region12: #{text_encoder_block.1} parent=1 // pred_region
      %s139 = ssub.s32 256, 256
      %140 = vsyncadd [#allocation5], %s139
      %s141 = sshll.u32 [#allocation4], 4
      %s142 = int_to_ptr.vmem [resolvable:$true] %s141
      %147 = dma.vmem_to_hbm [thread:$0]  %s142, 256, %s3, [#allocation5], 128, 128, 8
    $region13: #{text_encoder_block.1} parent=1 // pred_fallthru
      _
    // Predicated region
    $region14: #{text_encoder_block.1} parent=1 // pred_check
      _
    $region15: #{text_encoder_block.1} parent=1 // pred_check_branch
      %149 = sbr.rel (0) target = $region17
    $region16: #{text_encoder_block.1} parent=1 // pred_region
      %s151 = ssub.s32 256, 256
      %152 = vsyncadd [#allocation7], %s151
      %s153 = sshll.u32 [#allocation6], 4
      %s154 = int_to_ptr.vmem [resolvable:$true] %s153
      %159 = dma.vmem_to_hbm [thread:$0]  %s154, 256, %s4, [#allocation7], 128, 128, 8
    $region17: #{text_encoder_block.1} parent=1 // pred_fallthru
      _
    // Predicated region
    $region18: #{text_encoder_block.1} parent=1 // pred_check
      _
    $region19: #{text_encoder_block.1} parent=1 // pred_check_branch
      %161 = sbr.rel (0) target = $region21
    $region20: #{text_encoder_block.1} parent=1 // pred_region
      %162 = dma.done [#allocation5], 256
    $region21: #{text_encoder_block.1} parent=1 // pred_fallthru
      _
    // Predicated region
    $region22: #{text_encoder_block.1} parent=1 // pred_check
      _
    $region23: #{text_encoder_block.1} parent=1 // pred_check_branch
      %164 = sbr.rel (0) target = $region25
    $region24: #{text_encoder_block.1} parent=1 // pred_region
      %165 = dma.done [#allocation7], 256
    $region25: #{text_encoder_block.1} parent=1 // pred_fallthru
      _
    %166 = vsyncpa [#allocation5], 1
    %167 = vsyncpa [#allocation7], 1

</llo_original>
